<compile_context>
chip_gen: v7x
topology: tpu7x:2x2x1
jax: 0.10.0
libtpu: 0.0.40
codegen_flags: <defaults>
</compile_context>

<pallas_src>
import jax
import jax.numpy as jnp
from jax.experimental import pallas as pl
from jax.experimental.pallas import tpu as pltpu

HIDDEN = 256


def _round_up(x, m):
    return ((x + m - 1) // m) * m


def critic_kernel(x_ref, w1_ref, b1_ref, w2_ref, b2_ref, w3_ref, b3_ref, o_ref):
    """One batch tile.

    x:  (tile_b, in_dim) f32   w1: (in_dim, H) f32   b1: (1, H) f32
    w2: (H, H) bf16            b2: (1, H) f32
    w3: (1, H) f32 (head weights as a row)           b3: (1, 1) f32
    o:  (1, 1, tile_b) f32  -- one value per batch row, lane-dense along batch
    """
    x = x_ref[...]                                          # (tile_b, in_dim) f32
    in_dim = x.shape[1]

    # ---- Layer 1: tiny contraction (K = in_dim) on the VPU, exact f32. ----
    h1 = b1_ref[...] + x[:, 0:1] * w1_ref[0:1, :]
    for k in range(1, in_dim):                              # static, ~3 more broadcast-FMAs
        h1 = h1 + x[:, k:k + 1] * w1_ref[k:k + 1, :]
    h1b = jnp.maximum(h1, 0.0).astype(jnp.bfloat16)         # fused ReLU + downcast

    # ---- Layer 2: 256x256 on the MXU, bf16 in / f32 accumulate. ----
    h2 = jnp.dot(h1b, w2_ref[...], preferred_element_type=jnp.float32) + b2_ref[...]
    h2 = jnp.maximum(h2, 0.0)                               # f32 ReLU on the VPU

    # ---- Head: (H -> 1) as VPU multiply + XLU lane reduce; batch -> lanes. ----
    v = jnp.sum(h2 * w3_ref[...], axis=-1)                  # (tile_b,)
    row = (v[None, :] + b3_ref[...]).astype(o_ref.dtype)    # (1, tile_b)
    o_ref[...] = row[None]                                  # (1, 1, tile_b)


def _choose_tile_b(B):
    """>= 2 grid steps when possible (v7x megacore); 8-aligned for small B,
    128-aligned (MXU M rows / unmasked stores) for B > 128."""
    if B <= 16:
        return 8
    if B <= 128:
        return _round_up(pl.cdiv(_round_up(B, 8), 2), 8)
    return min(256, _round_up(pl.cdiv(_round_up(B, 128), 2), 128))


def critic_forward(x, params, *, tile_b=None):
    """x: (B, input_dim) f32 -> v: (B, 1) f32."""
    w1, b1, w2, b2, w3, b3 = params
    B, in_dim = x.shape
    H = w1.shape[1]
    assert w1.shape == (in_dim, H) and w2.shape == (H, H)
    assert b1.shape == (1, H) and b2.shape == (1, H)
    assert w3.shape == (1, H) and b3.shape == (1, 1), "head must be a (1, H) row + (1, 1) bias"

    if tile_b is None:
        tile_b = _choose_tile_b(B)
    tile_b = max(8, _round_up(int(tile_b), 8))
    num_tiles = pl.cdiv(B, tile_b)
    B_pad = num_tiles * tile_b
    if B_pad != B:
        x = jnp.pad(x, ((0, B_pad - B), (0, 0)))            # padded rows are sliced off below

    # Weights/biases: full resident blocks, fetched once (constant index_map).
    resident = lambda shape: pl.BlockSpec(shape, lambda i, _s=len(shape): (0,) * _s)

    weight_bytes = sum(int(a.size) * a.dtype.itemsize for a in (w1, b1, w2, b2, w3, b3))
    cost = pl.CostEstimate(
        flops=2 * B_pad * (in_dim * H + H * H + H),
        transcendentals=0,
        bytes_accessed=int(x.size) * 4 + weight_bytes + B_pad * 4,
    )

    out = pl.pallas_call(
        critic_kernel,
        out_shape=jax.ShapeDtypeStruct((num_tiles, 1, tile_b), jnp.float32),
        grid=(num_tiles,),
        in_specs=[
            pl.BlockSpec((tile_b, in_dim), lambda i: (i, 0)),   # activation tile
            resident(w1.shape), resident(b1.shape),
            resident(w2.shape), resident(b2.shape),
            resident(w3.shape), resident(b3.shape),
        ],
        out_specs=pl.BlockSpec((1, 1, tile_b), lambda i: (i, 0, 0)),
        compiler_params=pltpu.CompilerParams(
            dimension_semantics=("parallel",),   # batch tiles shard across TCs on v7x
        ),
        cost_estimate=cost,
    )(x, w1, b1, w2, b2, w3, b3)

    return out.reshape(-1)[:B].reshape(B, 1)


def init_critic_params(key, input_dim, hidden=HIDDEN):
    """Mirror CriticNet.__init__: all weights ~ N(0, 0.1); biases keep the
    PyTorch nn.Linear default U(+-1/sqrt(fan_in)). Kernel layout: w1/w3 stay
    f32 (VPU paths); w2 is bf16 for the MXU (f32 accumulation) -- a documented
    small deviation from the all-f32 PyTorch module; the head is stored as a
    (1, hidden) row for the VPU reduction."""
    k1, k2, k3, k4, k5, k6 = jax.random.split(key, 6)
    w1 = 0.1 * jax.random.normal(k1, (input_dim, hidden), jnp.float32)
    w2 = (0.1 * jax.random.normal(k2, (hidden, hidden), jnp.float32)).astype(jnp.bfloat16)
    w3 = 0.1 * jax.random.normal(k3, (1, hidden), jnp.float32)          # head as a row

    bnd1 = 1.0 / jnp.sqrt(float(input_dim))
    bnd2 = 1.0 / jnp.sqrt(float(hidden))
    b1 = jax.random.uniform(k4, (1, hidden), jnp.float32, -bnd1, bnd1)
    b2 = jax.random.uniform(k5, (1, hidden), jnp.float32, -bnd2, bnd2)
    b3 = jax.random.uniform(k6, (1, 1), jnp.float32, -bnd2, bnd2)
    return (w1, b1, w2, b2, w3, b3)


if __name__ == "__main__":
    key = jax.random.PRNGKey(0)
    B, input_dim = 64, 4   # small RL state-vector batch

    k_x, k_p = jax.random.split(key, 2)
    x = jax.random.normal(k_x, (B, input_dim), jnp.float32)
    params = init_critic_params(k_p, input_dim)

    v = critic_forward(x, params)
    jax.block_until_ready(v)
    assert v.shape == (B, 1)

    # Pure-JAX reference with matching numerics (f32 layer 1, bf16 MXU layer 2,
    # f32 head reduction).
    w1, b1, w2, b2, w3, b3 = params
    h1 = jnp.maximum(jnp.dot(x, w1, precision=jax.lax.Precision.HIGHEST) + b1, 0.0)
    h2 = jnp.maximum(
        jnp.dot(h1.astype(jnp.bfloat16), w2, preferred_element_type=jnp.float32) + b2, 0.0)
    ref = jnp.sum(h2 * w3, axis=-1, keepdims=True) + b3
    assert jnp.allclose(v, ref, atol=2e-3, rtol=2e-3), "mismatch vs reference"

    print("KERNEL_OK")
</pallas_src>

<mosaic_0001>
module attributes {stable_mosaic.version = 11 : i64} {
  func.func @critic_kernel(%arg0: i32, %arg1: memref<32x4xf32, #tpu.memory_space<vmem>>, %arg2: memref<4x256xf32, #tpu.memory_space<vmem>>, %arg3: memref<1x256xf32, #tpu.memory_space<vmem>>, %arg4: memref<256x256xbf16, #tpu.memory_space<vmem>>, %arg5: memref<1x256xf32, #tpu.memory_space<vmem>>, %arg6: memref<1x256xf32, #tpu.memory_space<vmem>>, %arg7: memref<1x1xf32, #tpu.memory_space<vmem>>, %arg8: memref<1x1x32xf32, #tpu.memory_space<vmem>>) attributes {dimension_semantics = [#tpu.dimension_semantics<parallel>], iteration_bounds = array<i64: 2>, scalar_prefetch = 0 : i64, scratch_operands = 0 : i64, tpu.core_type = #tpu.core_type<tc>, window_params = [{transform_indices = @transform_0, window_bounds = array<i64: 32, 4>}, {pipeline_mode = #tpu.pipeline_mode<synchronous>, transform_indices = @transform_1, window_bounds = array<i64: 4, 256>}, {pipeline_mode = #tpu.pipeline_mode<synchronous>, transform_indices = @transform_2, window_bounds = array<i64: 1, 256>}, {pipeline_mode = #tpu.pipeline_mode<synchronous>, transform_indices = @transform_3, window_bounds = array<i64: 256, 256>}, {pipeline_mode = #tpu.pipeline_mode<synchronous>, transform_indices = @transform_4, window_bounds = array<i64: 1, 256>}, {pipeline_mode = #tpu.pipeline_mode<synchronous>, transform_indices = @transform_5, window_bounds = array<i64: 1, 256>}, {pipeline_mode = #tpu.pipeline_mode<synchronous>, transform_indices = @transform_6, window_bounds = array<i64: 1, 1>}, {transform_indices = @transform_7, window_bounds = array<i64: 1, 1, 32>}]} {
    %c0 = arith.constant 0 : index
    %c0_0 = arith.constant 0 : index
    %0 = vector.load %arg1[%c0, %c0_0] : memref<32x4xf32, #tpu.memory_space<vmem>>, vector<32x4xf32>
    %c0_1 = arith.constant 0 : index
    %c0_2 = arith.constant 0 : index
    %1 = vector.load %arg3[%c0_1, %c0_2] : memref<1x256xf32, #tpu.memory_space<vmem>>, vector<1x256xf32>
    %2 = vector.extract_strided_slice %0 {offsets = [0, 0], sizes = [32, 1], strides = [1, 1]} : vector<32x4xf32> to vector<32x1xf32>
    %c0_3 = arith.constant 0 : index
    %c0_4 = arith.constant 0 : index
    %3 = vector.load %arg2[%c0_3, %c0_4] : memref<4x256xf32, #tpu.memory_space<vmem>>, vector<1x256xf32>
    %4 = vector.broadcast %2 : vector<32x1xf32> to vector<32x256xf32>
    %5 = vector.broadcast %3 : vector<1x256xf32> to vector<32x256xf32>
    %6 = arith.mulf %4, %5 : vector<32x256xf32>
    %7 = vector.broadcast %1 : vector<1x256xf32> to vector<32x256xf32>
    %8 = arith.addf %7, %6 : vector<32x256xf32>
    %9 = vector.extract_strided_slice %0 {offsets = [0, 1], sizes = [32, 1], strides = [1, 1]} : vector<32x4xf32> to vector<32x1xf32>
    %c1 = arith.constant 1 : index
    %c0_5 = arith.constant 0 : index
    %10 = vector.load %arg2[%c1, %c0_5] : memref<4x256xf32, #tpu.memory_space<vmem>>, vector<1x256xf32>
    %11 = vector.broadcast %9 : vector<32x1xf32> to vector<32x256xf32>
    %12 = vector.broadcast %10 : vector<1x256xf32> to vector<32x256xf32>
    %13 = arith.mulf %11, %12 : vector<32x256xf32>
    %14 = arith.addf %8, %13 : vector<32x256xf32>
    %15 = vector.extract_strided_slice %0 {offsets = [0, 2], sizes = [32, 1], strides = [1, 1]} : vector<32x4xf32> to vector<32x1xf32>
    %c2 = arith.constant 2 : index
    %c0_6 = arith.constant 0 : index
    %16 = vector.load %arg2[%c2, %c0_6] : memref<4x256xf32, #tpu.memory_space<vmem>>, vector<1x256xf32>
    %17 = vector.broadcast %15 : vector<32x1xf32> to vector<32x256xf32>
    %18 = vector.broadcast %16 : vector<1x256xf32> to vector<32x256xf32>
    %19 = arith.mulf %17, %18 : vector<32x256xf32>
    %20 = arith.addf %14, %19 : vector<32x256xf32>
    %21 = vector.extract_strided_slice %0 {offsets = [0, 3], sizes = [32, 1], strides = [1, 1]} : vector<32x4xf32> to vector<32x1xf32>
    %c3 = arith.constant 3 : index
    %c0_7 = arith.constant 0 : index
    %22 = vector.load %arg2[%c3, %c0_7] : memref<4x256xf32, #tpu.memory_space<vmem>>, vector<1x256xf32>
    %23 = vector.broadcast %21 : vector<32x1xf32> to vector<32x256xf32>
    %24 = vector.broadcast %22 : vector<1x256xf32> to vector<32x256xf32>
    %25 = arith.mulf %23, %24 : vector<32x256xf32>
    %26 = arith.addf %20, %25 : vector<32x256xf32>
    %cst = arith.constant 0.000000e+00 : f32
    %27 = vector.broadcast %cst : f32 to vector<32x256xf32>
    %28 = arith.maximumf %26, %27 : vector<32x256xf32>
    %29 = arith.truncf %28 : vector<32x256xf32> to vector<32x256xbf16>
    %c0_8 = arith.constant 0 : index
    %c0_9 = arith.constant 0 : index
    %30 = vector.load %arg4[%c0_8, %c0_9] : memref<256x256xbf16, #tpu.memory_space<vmem>>, vector<256x256xbf16>
    %cst_10 = arith.constant dense<0.000000e+00> : vector<32x256xf32>
    %31 = tpu.matmul %29, %30, %cst_10 {dimension_numbers = #tpu.dot_dimension_numbers<[1], [0], [0], [1], [0, 0, 1, 1], [], []>} : vector<32x256xbf16>, vector<256x256xbf16>, vector<32x256xf32> -> vector<32x256xf32>
    %c0_11 = arith.constant 0 : index
    %c0_12 = arith.constant 0 : index
    %32 = vector.load %arg5[%c0_11, %c0_12] : memref<1x256xf32, #tpu.memory_space<vmem>>, vector<1x256xf32>
    %33 = vector.broadcast %32 : vector<1x256xf32> to vector<32x256xf32>
    %34 = arith.addf %31, %33 : vector<32x256xf32>
    %cst_13 = arith.constant 0.000000e+00 : f32
    %35 = vector.broadcast %cst_13 : f32 to vector<32x256xf32>
    %36 = arith.maximumf %34, %35 : vector<32x256xf32>
    %c0_14 = arith.constant 0 : index
    %c0_15 = arith.constant 0 : index
    %37 = vector.load %arg6[%c0_14, %c0_15] : memref<1x256xf32, #tpu.memory_space<vmem>>, vector<1x256xf32>
    %38 = vector.broadcast %37 : vector<1x256xf32> to vector<32x256xf32>
    %39 = arith.mulf %36, %38 : vector<32x256xf32>
    %cst_16 = arith.constant dense<0.000000e+00> : vector<32xf32>
    %40 = vector.multi_reduction <add>, %39, %cst_16 [1] : vector<32x256xf32> to vector<32xf32>
    %41 = vector.shape_cast %40 : vector<32xf32> to vector<1x32xf32>
    %c0_17 = arith.constant 0 : index
    %c0_18 = arith.constant 0 : index
    %42 = vector.load %arg7[%c0_17, %c0_18] : memref<1x1xf32, #tpu.memory_space<vmem>>, vector<1x1xf32>
    %43 = vector.broadcast %42 : vector<1x1xf32> to vector<1x32xf32>
    %44 = arith.addf %41, %43 : vector<1x32xf32>
    %45 = vector.shape_cast %44 : vector<1x32xf32> to vector<1x1x32xf32>
    %c0_19 = arith.constant 0 : index
    %c0_20 = arith.constant 0 : index
    %c0_21 = arith.constant 0 : index
    %46 = vector.load %arg8[%c0_19, %c0_20, %c0_21] : memref<1x1x32xf32, #tpu.memory_space<vmem>>, vector<1x1x32xf32>
    tpu.vector_store %arg8[%c0_19, %c0_20, %c0_21], %45 {strides = array<i32>} : memref<1x1x32xf32, #tpu.memory_space<vmem>>, vector<1x1x32xf32>,
    return
  }
  func.func @transform_0(%arg0: i32) -> (i32, i32) {
    %c0_i32 = arith.constant 0 : i32
    %c0_i32_0 = arith.constant 0 : i32
    return %arg0, %c0_i32 : i32, i32
  }
  func.func @transform_1(%arg0: i32) -> (i32, i32) {
    %c0_i32 = arith.constant 0 : i32
    %c0_i32_0 = arith.constant 0 : i32
    %c0_i32_1 = arith.constant 0 : i32
    return %c0_i32, %c0_i32_0 : i32, i32
  }
  func.func @transform_2(%arg0: i32) -> (i32, i32) {
    %c0_i32 = arith.constant 0 : i32
    %c0_i32_0 = arith.constant 0 : i32
    %c0_i32_1 = arith.constant 0 : i32
    return %c0_i32, %c0_i32_0 : i32, i32
  }
  func.func @transform_3(%arg0: i32) -> (i32, i32) {
    %c0_i32 = arith.constant 0 : i32
    %c0_i32_0 = arith.constant 0 : i32
    %c0_i32_1 = arith.constant 0 : i32
    return %c0_i32, %c0_i32_0 : i32, i32
  }
  func.func @transform_4(%arg0: i32) -> (i32, i32) {
    %c0_i32 = arith.constant 0 : i32
    %c0_i32_0 = arith.constant 0 : i32
    %c0_i32_1 = arith.constant 0 : i32
    return %c0_i32, %c0_i32_0 : i32, i32
  }
  func.func @transform_5(%arg0: i32) -> (i32, i32) {
    %c0_i32 = arith.constant 0 : i32
    %c0_i32_0 = arith.constant 0 : i32
    %c0_i32_1 = arith.constant 0 : i32
    return %c0_i32, %c0_i32_0 : i32, i32
  }
  func.func @transform_6(%arg0: i32) -> (i32, i32) {
    %c0_i32 = arith.constant 0 : i32
    %c0_i32_0 = arith.constant 0 : i32
    %c0_i32_1 = arith.constant 0 : i32
    return %c0_i32, %c0_i32_0 : i32, i32
  }
  func.func @transform_7(%arg0: i32) -> (i32, i32, i32) {
    %c0_i32 = arith.constant 0 : i32
    %c0_i32_0 = arith.constant 0 : i32
    %c0_i32_1 = arith.constant 0 : i32
    return %arg0, %c0_i32, %c0_i32_0 : i32, i32, i32
  }
}

</mosaic_0001>

<llo_original>
// kernel: tpu_custom_call.1
$region0: #{tpu_custom_call.1}
  #allocation0 [shape = 'u32[]', space=smem, size = 0x4, offset = 0x4, fixed_abs, tag = 'smem constant byte address 0x4 - core index']
  #allocation1 [shape = 'u32[144,128]{1,0:T(1,128)}', space=vmem, size = 0x12000, scoped, tag = 'internal scratch']
  #allocation2 [shape = 'f32[1,1]{1,0:T(1,128)S(1)}', space=vmem, size = 0x200, scoped, tag = 'scoped memory for tpu_custom_call.1']
  %s0 = inlined_call_operand.vmem [shape: f32[64,4], index: 0, kind: input, shape index: {}]
  %s1 = inlined_call_operand.vmem [shape: f32[4,256], index: 1, kind: input, shape index: {}]
  %s2 = inlined_call_operand.vmem [shape: f32[1,256], index: 2, kind: input, shape index: {}]
  %s3 = inlined_call_operand.hbm [shape: bf16[256,256], index: 3, kind: input, shape index: {}]
  %s4 = inlined_call_operand.vmem [shape: f32[1,256], index: 4, kind: input, shape index: {}]
  %s5 = inlined_call_operand.vmem [shape: f32[1,256], index: 5, kind: input, shape index: {}]
  %s6 = inlined_call_operand.<no memory space> [shape: f32[1,1], index: 6, kind: input, shape index: {}]
  %s7 = inlined_call_operand.hbm [shape: f32[2,1,32], index: 7, kind: output, shape index: {}]
  %s8 = sld [smem:[#allocation0]]
  $region65: #{tpu_custom_call.1} parent=0
    _
  %s10 = ssub.s32 1, %s8
  %s11 = scalar_select 0, %s10, %s8
  %v12 = vstv %s6
  %13 = vst [vmem:[#allocation2] sm:$0x1] %v12
  $region1: #{tpu_custom_call.1} parent=0
    #allocation3 [shape = 'u8[131072]{0}', space=vmem, size = 0x20000, scoped, tag = 'input window, operand 3, single buffered']
    #allocation4 [shape = 's32[2]{0}', space=sflag, size = 0x8, scoped, tag = 'scoped memory for tpu_custom_call.1']
    #allocation5 [shape = 's32[2]{0}', space=sflag, size = 0x8, scoped, tag = 'scoped memory for tpu_custom_call.1']
    #allocation6 [shape = 'u8[1024]{0}', space=vmem, size = 0x400, scoped, tag = 'output window, operand 0']
    %14 = vsyncpa [#allocation4], 0
    %15 = vsyncpa [#allocation5], 0
    %s16 = scalar_lea.sflag [#allocation5], 1
    %17 = vsyncpa %s16, 0
    loop: start=0, step=1, limit=4
    $region2: #{tpu_custom_call.1} parent=1 // loop_pre_header
      _
    $region3: #{tpu_custom_call.1} parent=1 // loop_header
      %s19 = sphi 0, %s23
      %p20 = scmp.ge.s32.totalorder %s19, 4
      %s29 = sphi 0, %s31
      %s32 = sphi 0, %s29
      %s33 = sphi 0, %s32
      %s49 = sphi 0, %s33
      %s53 = sphi 0, %s53
      %s55 = sphi 0, %s53
      %s56 = sphi 0, %s55
      %s70 = sphi 0, %s56
      %s74 = sphi 0, %s74
      %s76 = sphi 0, %s74
      %s77 = sphi 0, %s76
      %s91 = sphi 0, %s77
      %s95 = sphi 0, %s95
      %s97 = sphi 0, %s95
      %s98 = sphi 0, %s97
      %s112 = sphi 0, %s98
      %s116 = sphi 0, %s116
      %s118 = sphi 0, %s116
      %s119 = sphi 0, %s118
      %s133 = sphi 0, %s119
      %s137 = sphi 0, %s137
      %s139 = sphi 0, %s137
      %s140 = sphi 0, %s139
      %s154 = sphi 0, %s140
      %s158 = sphi 0, %s158
      %s160 = sphi 0, %s158
      %s161 = sphi 0, %s160
      %s175 = sphi 0, %s161
      %s181 = sphi 0, %s183
      %s184 = sphi 0, %s181
      %s185 = sphi 0, %s184
      %s201 = sphi 0, %s185
    $region4: #{tpu_custom_call.1} parent=1 // loop_header_branch
      %22 = sbr.rel (%p20) target = $region8
    $region5: #{tpu_custom_call.1} parent=1 // loop_body
      %s24 = ssub.s32 %s19, 1
      %s25 = ssub.s32 %s19, 2
      %s26 = sadd.s32 %s19, 1
      %s27 = ssub.s32 %s19, %s26
      %p28 = scmp.eq.s32.totalorder %s27, 0
      %s30 = sadd.s32 %s29, 1
      %s31 = scalar_select %p28, %s29, %s30
      %p34 = pneg %p28
      %p35 = scmp.eq.s32.totalorder %s19, 1
      %p36 = por %p34, %p35
      %p37 = scmp.ne.s32.totalorder %s29, %s32
      %p38 = scmp.eq.s32.totalorder %s19, 0
      %p39 = por %p37, %p38
      %p40 = scmp.ne.s32.totalorder %s29, %s32
      %p41 = scmp.eq.s32.totalorder %s24, 1
      %p42 = por %p40, %p41
      %p43 = scmp.ne.s32.totalorder %s32, %s33
      %p44 = scmp.eq.s32.totalorder %s24, 0
      %p45 = por %p43, %p44
      %p46 = scmp.ne.s32.totalorder %s32, %s33
      %p47 = scmp.eq.s32.totalorder %s25, 1
      %p48 = por %p46, %p47
      %p50 = scmp.ne.s32.totalorder %s33, %s49
      %p51 = scmp.eq.s32.totalorder %s25, 0
      %p52 = por %p50, %p51
      %s54 = sadd.s32 %s53, 1
      %p57 = scmp.eq.s32.totalorder %s19, 1
      %p58 = scmp.ne.s32.totalorder %s53, %s55
      %p59 = scmp.eq.s32.totalorder %s19, 0
      %p60 = por %p58, %p59
      %p61 = scmp.ne.s32.totalorder %s53, %s55
      %p62 = scmp.eq.s32.totalorder %s24, 1
      %p63 = por %p61, %p62
      %p64 = scmp.ne.s32.totalorder %s55, %s56
      %p65 = scmp.eq.s32.totalorder %s24, 0
      %p66 = por %p64, %p65
      %p67 = scmp.ne.s32.totalorder %s55, %s56
      %p68 = scmp.eq.s32.totalorder %s25, 1
      %p69 = por %p67, %p68
      %p71 = scmp.ne.s32.totalorder %s56, %s70
      %p72 = scmp.eq.s32.totalorder %s25, 0
      %p73 = por %p71, %p72
      %s75 = sadd.s32 %s74, 1
      %p78 = scmp.eq.s32.totalorder %s19, 1
      %p79 = scmp.ne.s32.totalorder %s74, %s76
      %p80 = scmp.eq.s32.totalorder %s19, 0
      %p81 = por %p79, %p80
      %p82 = scmp.ne.s32.totalorder %s74, %s76
      %p83 = scmp.eq.s32.totalorder %s24, 1
      %p84 = por %p82, %p83
      %p85 = scmp.ne.s32.totalorder %s76, %s77
      %p86 = scmp.eq.s32.totalorder %s24, 0
      %p87 = por %p85, %p86
      %p88 = scmp.ne.s32.totalorder %s76, %s77
      %p89 = scmp.eq.s32.totalorder %s25, 1
      %p90 = por %p88, %p89
      %p92 = scmp.ne.s32.totalorder %s77, %s91
      %p93 = scmp.eq.s32.totalorder %s25, 0
      %p94 = por %p92, %p93
      %s96 = sadd.s32 %s95, 1
      %p99 = scmp.eq.s32.totalorder %s19, 1
      %p100 = scmp.ne.s32.totalorder %s95, %s97
      %p101 = scmp.eq.s32.totalorder %s19, 0
      %p102 = por %p100, %p101
      %p103 = scmp.ne.s32.totalorder %s95, %s97
      %p104 = scmp.eq.s32.totalorder %s24, 1
      %p105 = por %p103, %p104
      %p106 = scmp.ne.s32.totalorder %s97, %s98
      %p107 = scmp.eq.s32.totalorder %s24, 0
      %p108 = por %p106, %p107
      %p109 = scmp.ne.s32.totalorder %s97, %s98
      %p110 = scmp.eq.s32.totalorder %s25, 1
      %p111 = por %p109, %p110
      %p113 = scmp.ne.s32.totalorder %s98, %s112
      %p114 = scmp.eq.s32.totalorder %s25, 0
      %p115 = por %p113, %p114
      %s117 = sadd.s32 %s116, 1
      %p120 = scmp.eq.s32.totalorder %s19, 1
      %p121 = scmp.ne.s32.totalorder %s116, %s118
      %p122 = scmp.eq.s32.totalorder %s19, 0
      %p123 = por %p121, %p122
      %p124 = scmp.ne.s32.totalorder %s116, %s118
      %p125 = scmp.eq.s32.totalorder %s24, 1
      %p126 = por %p124, %p125
      %p127 = scmp.ne.s32.totalorder %s118, %s119
      %p128 = scmp.eq.s32.totalorder %s24, 0
      %p129 = por %p127, %p128
      %p130 = scmp.ne.s32.totalorder %s118, %s119
      %p131 = scmp.eq.s32.totalorder %s25, 1
      %p132 = por %p130, %p131
      %p134 = scmp.ne.s32.totalorder %s119, %s133
      %p135 = scmp.eq.s32.totalorder %s25, 0
      %p136 = por %p134, %p135
      %s138 = sadd.s32 %s137, 1
      %p141 = scmp.eq.s32.totalorder %s19, 1
      %p142 = scmp.ne.s32.totalorder %s137, %s139
      %p143 = scmp.eq.s32.totalorder %s19, 0
      %p144 = por %p142, %p143
      %p145 = scmp.ne.s32.totalorder %s137, %s139
      %p146 = scmp.eq.s32.totalorder %s24, 1
      %p147 = por %p145, %p146
      %p148 = scmp.ne.s32.totalorder %s139, %s140
      %p149 = scmp.eq.s32.totalorder %s24, 0
      %p150 = por %p148, %p149
      %p151 = scmp.ne.s32.totalorder %s139, %s140
      %p152 = scmp.eq.s32.totalorder %s25, 1
      %p153 = por %p151, %p152
      %p155 = scmp.ne.s32.totalorder %s140, %s154
      %p156 = scmp.eq.s32.totalorder %s25, 0
      %p157 = por %p155, %p156
      %s159 = sadd.s32 %s158, 1
      %p162 = scmp.eq.s32.totalorder %s19, 1
      %p163 = scmp.ne.s32.totalorder %s158, %s160
      %p164 = scmp.eq.s32.totalorder %s19, 0
      %p165 = por %p163, %p164
      %p166 = scmp.ne.s32.totalorder %s158, %s160
      %p167 = scmp.eq.s32.totalorder %s24, 1
      %p168 = por %p166, %p167
      %p169 = scmp.ne.s32.totalorder %s160, %s161
      %p170 = scmp.eq.s32.totalorder %s24, 0
      %p171 = por %p169, %p170
      %p172 = scmp.ne.s32.totalorder %s160, %s161
      %p173 = scmp.eq.s32.totalorder %s25, 1
      %p174 = por %p172, %p173
      %p176 = scmp.ne.s32.totalorder %s161, %s175
      %p177 = scmp.eq.s32.totalorder %s25, 0
      %p178 = por %p176, %p177
      %s179 = ssub.s32 %s19, %s26
      %p180 = scmp.eq.s32.totalorder %s179, 0
      %s182 = sadd.s32 %s181, 1
      %s183 = scalar_select %p180, %s181, %s182
      %p186 = pneg %p180
      %p187 = scmp.eq.s32.totalorder %s19, 1
      %p188 = por %p186, %p187
      %p189 = scmp.ne.s32.totalorder %s181, %s184
      %p190 = scmp.eq.s32.totalorder %s19, 0
      %p191 = por %p189, %p190
      %p192 = scmp.ne.s32.totalorder %s181, %s184
      %p193 = scmp.eq.s32.totalorder %s24, 1
      %p194 = por %p192, %p193
      %p195 = scmp.ne.s32.totalorder %s184, %s185
      %p196 = scmp.eq.s32.totalorder %s24, 0
      %p197 = por %p195, %p196
      %p198 = scmp.ne.s32.totalorder %s184, %s185
      %p199 = scmp.eq.s32.totalorder %s25, 1
      %p200 = por %p198, %p199
      %p202 = scmp.ne.s32.totalorder %s185, %s201
      %p203 = scmp.eq.s32.totalorder %s25, 0
      %p204 = por %p202, %p203
      %p205 = scmp.le.s32.totalorder 1, %s19
      %p206 = scmp.lt.s32.totalorder %s19, 3
      %p207 = pnand %p205, %p206
      %p208 = pneg %p207
      // Predicated region
      $region9: #{tpu_custom_call.1} parent=5 // pred_check
        _
      $region10: #{tpu_custom_call.1} parent=5 // pred_check_branch
        %210 = sbr.rel (%p207) target = $region12
      $region11: #{tpu_custom_call.1} parent=5 // pred_region
        %s211 = ssub.s32 %s19, 1
        // Predicated region
        $region13: #{tpu_custom_call.1} parent=11 // pred_check
          %p212 = pneg %p66
        $region14: #{tpu_custom_call.1} parent=11 // pred_check_branch
          %214 = sbr.rel (%p212) target = $region16
        $region15: #{tpu_custom_call.1} parent=11 // pred_region
          _
        $region16: #{tpu_custom_call.1} parent=11 // pred_fallthru
          _
        // Predicated region
        $region17: #{tpu_custom_call.1} parent=11 // pred_check
          %p215 = pneg %p87
        $region18: #{tpu_custom_call.1} parent=11 // pred_check_branch
          %217 = sbr.rel (%p215) target = $region20
        $region19: #{tpu_custom_call.1} parent=11 // pred_region
          _
        $region20: #{tpu_custom_call.1} parent=11 // pred_fallthru
          _
        // Predicated region
        $region21: #{tpu_custom_call.1} parent=11 // pred_check
          %p218 = pneg %p108
        $region22: #{tpu_custom_call.1} parent=11 // pred_check_branch
          %220 = sbr.rel (%p218) target = $region24
        $region23: #{tpu_custom_call.1} parent=11 // pred_region
          %s222 = ssub.s32 4096, 4096
          %223 = vsyncadd [#allocation4], %s222
          %s224 = sshll.u32 [#allocation3], 4
          %s225 = int_to_ptr.vmem [resolvable:$true] %s224
          %230 = dma.hbm_to_vmem [thread:$0]  %s3, 4096, %s225, [#allocation4], 128, 128, 8
        $region24: #{tpu_custom_call.1} parent=11 // pred_fallthru
          _
        // Predicated region
        $region25: #{tpu_custom_call.1} parent=11 // pred_check
          %p231 = pneg %p129
        $region26: #{tpu_custom_call.1} parent=11 // pred_check_branch
          %233 = sbr.rel (%p231) target = $region28
        $region27: #{tpu_custom_call.1} parent=11 // pred_region
          _
        $region28: #{tpu_custom_call.1} parent=11 // pred_fallthru
          _
        // Predicated region
        $region29: #{tpu_custom_call.1} parent=11 // pred_check
          %p234 = pneg %p150
        $region30: #{tpu_custom_call.1} parent=11 // pred_check_branch
          %236 = sbr.rel (%p234) target = $region32
        $region31: #{tpu_custom_call.1} parent=11 // pred_region
          _
        $region32: #{tpu_custom_call.1} parent=11 // pred_fallthru
          _
        // Predicated region
        $region33: #{tpu_custom_call.1} parent=11 // pred_check
          %p237 = pneg %p171
        $region34: #{tpu_custom_call.1} parent=11 // pred_check_branch
          %239 = sbr.rel (%p237) target = $region36
        $region35: #{tpu_custom_call.1} parent=11 // pred_region
          _
        $region36: #{tpu_custom_call.1} parent=11 // pred_fallthru
          _
      $region12: #{tpu_custom_call.1} parent=5 // pred_fallthru
        _
      %p240 = scmp.lt.s32.totalorder %s19, 2
      // Predicated region
      $region37: #{tpu_custom_call.1} parent=5 // pred_check
        %p241 = pneg %p240
      $region38: #{tpu_custom_call.1} parent=5 // pred_check_branch
        %243 = sbr.rel (%p241) target = $region40
      $region39: #{tpu_custom_call.1} parent=5 // pred_region
        // Predicated region
        $region41: #{tpu_custom_call.1} parent=39 // pred_check
          %p244 = pneg %p39
        $region42: #{tpu_custom_call.1} parent=39 // pred_check_branch
          %246 = sbr.rel (%p244) target = $region44
        $region43: #{tpu_custom_call.1} parent=39 // pred_region
          %s247 = smul.u32 4, %s19
          %p248 = scmp.lt.s32.totalorder %s247, 7
          %s249 = scalar_select %p248, %s247, 7
          %s250 = smul.addr %s249, 8
          %s251 = scalar_lea.vmem %s0, %s250
          %s252 = smul.u32 4, %s19
        $region44: #{tpu_custom_call.1} parent=39 // pred_fallthru
          _
      $region40: #{tpu_custom_call.1} parent=5 // pred_fallthru
        _
      %p253 = scmp.le.s32.totalorder 1, %s19
      %p254 = scmp.lt.s32.totalorder %s19, 3
      %p255 = pnand %p253, %p254
      %p256 = pneg %p255
      // Predicated region
      $region45: #{tpu_custom_call.1} parent=5 // pred_check
        _
      $region46: #{tpu_custom_call.1} parent=5 // pred_check_branch
        %258 = sbr.rel (%p255) target = $region48
      $region47: #{tpu_custom_call.1} parent=5 // pred_region
        %s259 = ssub.s32 %s19, 1
        // Predicated region
        $region49: #{tpu_custom_call.1} parent=47 // pred_check
          %p260 = pneg %p108
        $region50: #{tpu_custom_call.1} parent=47 // pred_check_branch
          %262 = sbr.rel (%p260) target = $region52
        $region51: #{tpu_custom_call.1} parent=47 // pred_region
          %263 = dma.done [#allocation4], 4096
        $region52: #{tpu_custom_call.1} parent=47 // pred_fallthru
          _
        %s264 = smul.u32 4, %s24
        %p265 = scmp.lt.s32.totalorder %s264, 7
        %s266 = scalar_select %p265, %s264, 7
        %s267 = smul.addr %s266, 8
        %s268 = scalar_lea.vmem %s0, %s267
        %p269 = pneg %p45
        %p270 = pneg %p42
        %p271 = pneg %p66
        %p272 = pneg %p63
        %p273 = pneg %p87
        %p274 = pneg %p84
        %p275 = pneg %p108
        %p276 = pneg %p105
        %p277 = pneg %p129
        %p278 = pneg %p126
        %p279 = pneg %p150
        %p280 = pneg %p147
        %p281 = pneg %p171
        %p282 = pneg %p168
        %p283 = pneg %p197
        %p284 = pneg %p194
        %s285 = sand.u32 %s184, 1
        %s286 = scalar_lea.sflag [#allocation5], %s285
        %s287 = sand.u32 %s184, 1
        %s288 = scalar_lea.vmem [#allocation6], %s287
        %s289 = smul.u32 4, %s24
        %p290 = scmp.lt.s32.totalorder %s289, 7
        %s291 = scalar_select %p290, %s289, 7
        %s292 = smul.addr %s291, 8
        %s293 = scalar_lea.vmem %s0, %s292
        %s294 = smul.u32 4, %s24
        %v295 = vld [vmem:[%s293] sm:$0xff]
        %v296 = vld [vmem:[%s293 + $0x8] sm:$0xff]
        %v297 = vld [vmem:[%s293 + $0x10] sm:$0xff]
        %v298 = vld [vmem:[%s293 + $0x18] sm:$0xff]
        %v299 = vld [vmem:[%s2] sm:$0x3]
        %v300 = vld [vmem:[%s1] ss:$4 sm:$0x3]
        %302 = vset.pattern.permute.xlu0 0
        %303 = vperm.xlu0 %302, %v295
        %v304 = vpop.permute.xlu0 %303
        %307 = vset.pattern.permute.xlu0 0
        %308 = vperm.xlu0 %307, %v296
        %v309 = vpop.permute.xlu0 %308
        %312 = vset.pattern.permute.xlu0 0
        %313 = vperm.xlu0 %312, %v297
        %v314 = vpop.permute.xlu0 %313
        %317 = vset.pattern.permute.xlu0 0
        %318 = vperm.xlu0 %317, %v298
        %v319 = vpop.permute.xlu0 %318
        %v322 = vlaneseq
        %v323 = vshrl.u32 %v322, 7
        %v324 = vsub.s32 0, %v323
        %v325 = vrot.slane %v300, %v324
        %v326 = vlaneseq
        %v327 = vshrl.u32 %v326, 7
        %v328 = vsub.s32 1, %v327
        %v329 = vrot.slane %v300, %v328
        %v332 = vmul.f32 %v304, %v325
        %v333 = vmul.f32 %v304, %v329
        %v334 = vmul.f32 %v309, %v325
        %v335 = vmul.f32 %v309, %v329
        %v336 = vmul.f32 %v314, %v325
        %v337 = vmul.f32 %v314, %v329
        %v338 = vmul.f32 %v319, %v325
        %v339 = vmul.f32 %v319, %v329
        %v341 = vlaneseq
        %v342 = vshrl.u32 %v341, 7
        %v343 = vsub.s32 0, %v342
        %v344 = vrot.slane %v299, %v343
        %v345 = vlaneseq
        %v346 = vshrl.u32 %v345, 7
        %v347 = vsub.s32 1, %v346
        %v348 = vrot.slane %v299, %v347
        %v351 = vadd.f32 %v344, %v332
        %v352 = vadd.f32 %v348, %v333
        %v353 = vadd.f32 %v344, %v334
        %v354 = vadd.f32 %v348, %v335
        %v355 = vadd.f32 %v344, %v336
        %v356 = vadd.f32 %v348, %v337
        %v357 = vadd.f32 %v344, %v338
        %v358 = vadd.f32 %v348, %v339
        %s359 = scalar_lea.vmem %s1, 1
        %v360 = vld [vmem:[%s359] ss:$4 sm:$0x3]
        %361 = vset.pattern.permute.xlu0 1
        %362 = vperm.xlu0 %361, %v295
        %v363 = vpop.permute.xlu0 %362
        %365 = vset.pattern.permute.xlu0 1
        %366 = vperm.xlu0 %365, %v296
        %v367 = vpop.permute.xlu0 %366
        %369 = vset.pattern.permute.xlu0 1
        %370 = vperm.xlu0 %369, %v297
        %v371 = vpop.permute.xlu0 %370
        %373 = vset.pattern.permute.xlu0 1
        %374 = vperm.xlu0 %373, %v298
        %v375 = vpop.permute.xlu0 %374
        %v378 = vlaneseq
        %v379 = vshrl.u32 %v378, 7
        %v380 = vsub.s32 0, %v379
        %v381 = vrot.slane %v360, %v380
        %v382 = vlaneseq
        %v383 = vshrl.u32 %v382, 7
        %v384 = vsub.s32 1, %v383
        %v385 = vrot.slane %v360, %v384
        %v388 = vmul.f32 %v363, %v381
        %v389 = vmul.f32 %v363, %v385
        %v390 = vmul.f32 %v367, %v381
        %v391 = vmul.f32 %v367, %v385
        %v392 = vmul.f32 %v371, %v381
        %v393 = vmul.f32 %v371, %v385
        %v394 = vmul.f32 %v375, %v381
        %v395 = vmul.f32 %v375, %v385
        %v396 = vadd.f32 %v351, %v388
        %v397 = vadd.f32 %v352, %v389
        %v398 = vadd.f32 %v353, %v390
        %v399 = vadd.f32 %v354, %v391
        %v400 = vadd.f32 %v355, %v392
        %v401 = vadd.f32 %v356, %v393
        %v402 = vadd.f32 %v357, %v394
        %v403 = vadd.f32 %v358, %v395
        %s404 = scalar_lea.vmem %s1, 2
        %v405 = vld [vmem:[%s404] ss:$4 sm:$0x3]
        %406 = vset.pattern.permute.xlu0 2
        %407 = vperm.xlu0 %406, %v295
        %v408 = vpop.permute.xlu0 %407
        %410 = vset.pattern.permute.xlu0 2
        %411 = vperm.xlu0 %410, %v296
        %v412 = vpop.permute.xlu0 %411
        %414 = vset.pattern.permute.xlu0 2
        %415 = vperm.xlu0 %414, %v297
        %v416 = vpop.permute.xlu0 %415
        %418 = vset.pattern.permute.xlu0 2
        %419 = vperm.xlu0 %418, %v298
        %v420 = vpop.permute.xlu0 %419
        %v423 = vlaneseq
        %v424 = vshrl.u32 %v423, 7
        %v425 = vsub.s32 0, %v424
        %v426 = vrot.slane %v405, %v425
        %v427 = vlaneseq
        %v428 = vshrl.u32 %v427, 7
        %v429 = vsub.s32 1, %v428
        %v430 = vrot.slane %v405, %v429
        %v433 = vmul.f32 %v408, %v426
        %v434 = vmul.f32 %v408, %v430
        %v435 = vmul.f32 %v412, %v426
        %v436 = vmul.f32 %v412, %v430
        %v437 = vmul.f32 %v416, %v426
        %v438 = vmul.f32 %v416, %v430
        %v439 = vmul.f32 %v420, %v426
        %v440 = vmul.f32 %v420, %v430
        %v441 = vadd.f32 %v396, %v433
        %v442 = vadd.f32 %v397, %v434
        %v443 = vadd.f32 %v398, %v435
        %v444 = vadd.f32 %v399, %v436
        %v445 = vadd.f32 %v400, %v437
        %v446 = vadd.f32 %v401, %v438
        %v447 = vadd.f32 %v402, %v439
        %v448 = vadd.f32 %v403, %v440
        %s449 = scalar_lea.vmem %s1, 3
        %v450 = vld [vmem:[%s449] ss:$4 sm:$0x3]
        %451 = vset.pattern.permute.xlu0 3
        %452 = vperm.xlu0 %451, %v295
        %v453 = vpop.permute.xlu0 %452
        %455 = vset.pattern.permute.xlu0 3
        %456 = vperm.xlu0 %455, %v296
        %v457 = vpop.permute.xlu0 %456
        %459 = vset.pattern.permute.xlu0 3
        %460 = vperm.xlu0 %459, %v297
        %v461 = vpop.permute.xlu0 %460
        %463 = vset.pattern.permute.xlu0 3
        %464 = vperm.xlu0 %463, %v298
        %v465 = vpop.permute.xlu0 %464
        %v468 = vlaneseq
        %v469 = vshrl.u32 %v468, 7
        %v470 = vsub.s32 0, %v469
        %v471 = vrot.slane %v450, %v470
        %v472 = vlaneseq
        %v473 = vshrl.u32 %v472, 7
        %v474 = vsub.s32 1, %v473
        %v475 = vrot.slane %v450, %v474
        %v478 = vmul.f32 %v453, %v471
        %v479 = vmul.f32 %v453, %v475
        %v480 = vmul.f32 %v457, %v471
        %v481 = vmul.f32 %v457, %v475
        %v482 = vmul.f32 %v461, %v471
        %v483 = vmul.f32 %v461, %v475
        %v484 = vmul.f32 %v465, %v471
        %v485 = vmul.f32 %v465, %v475
        %v486 = vadd.f32 %v441, %v478
        %v487 = vadd.f32 %v442, %v479
        %v488 = vadd.f32 %v443, %v480
        %v489 = vadd.f32 %v444, %v481
        %v490 = vadd.f32 %v445, %v482
        %v491 = vadd.f32 %v446, %v483
        %v492 = vadd.f32 %v447, %v484
        %v493 = vadd.f32 %v448, %v485
        %v494 = vmax.f32 %v486, 0.0
        %v495 = vmax.f32 %v487, 0.0
        %v496 = vmax.f32 %v488, 0.0
        %v497 = vmax.f32 %v489, 0.0
        %v498 = vmax.f32 %v490, 0.0
        %v499 = vmax.f32 %v491, 0.0
        %v500 = vmax.f32 %v492, 0.0
        %v501 = vmax.f32 %v493, 0.0
        %v502 = vpack.c.bf16 %v496, %v494
        %v503 = vpack.c.bf16 %v497, %v495
        %v504 = vpack.c.bf16 %v500, %v498
        %v505 = vpack.c.bf16 %v501, %v499
        %v506 = vld [vmem:[#allocation3] sm:$0xff]
        %v507 = vld [vmem:[#allocation3 + $0x8] sm:$0xff]
        %v508 = vld [vmem:[#allocation3 + $0x10] sm:$0xff]
        %v509 = vld [vmem:[#allocation3 + $0x18] sm:$0xff]
        %v510 = vld [vmem:[#allocation3 + $0x20] sm:$0xff]
        %v511 = vld [vmem:[#allocation3 + $0x28] sm:$0xff]
        %v512 = vld [vmem:[#allocation3 + $0x30] sm:$0xff]
        %v513 = vld [vmem:[#allocation3 + $0x38] sm:$0xff]
        %v514 = vld [vmem:[#allocation3 + $0x40] sm:$0xff]
        %v515 = vld [vmem:[#allocation3 + $0x48] sm:$0xff]
        %v516 = vld [vmem:[#allocation3 + $0x50] sm:$0xff]
        %v517 = vld [vmem:[#allocation3 + $0x58] sm:$0xff]
        %v518 = vld [vmem:[#allocation3 + $0x60] sm:$0xff]
        %v519 = vld [vmem:[#allocation3 + $0x68] sm:$0xff]
        %v520 = vld [vmem:[#allocation3 + $0x70] sm:$0xff]
        %v521 = vld [vmem:[#allocation3 + $0x78] sm:$0xff]
        %v522 = vld [vmem:[#allocation3 + $0x80] sm:$0xff]
        %v523 = vld [vmem:[#allocation3 + $0x88] sm:$0xff]
        %v524 = vld [vmem:[#allocation3 + $0x90] sm:$0xff]
        %v525 = vld [vmem:[#allocation3 + $0x98] sm:$0xff]
        %v526 = vld [vmem:[#allocation3 + $0xa0] sm:$0xff]
        %v527 = vld [vmem:[#allocation3 + $0xa8] sm:$0xff]
        %v528 = vld [vmem:[#allocation3 + $0xb0] sm:$0xff]
        %v529 = vld [vmem:[#allocation3 + $0xb8] sm:$0xff]
        %v530 = vld [vmem:[#allocation3 + $0xc0] sm:$0xff]
        %v531 = vld [vmem:[#allocation3 + $0xc8] sm:$0xff]
        %v532 = vld [vmem:[#allocation3 + $0xd0] sm:$0xff]
        %v533 = vld [vmem:[#allocation3 + $0xd8] sm:$0xff]
        %v534 = vld [vmem:[#allocation3 + $0xe0] sm:$0xff]
        %v535 = vld [vmem:[#allocation3 + $0xe8] sm:$0xff]
        %v536 = vld [vmem:[#allocation3 + $0xf0] sm:$0xff]
        %v537 = vld [vmem:[#allocation3 + $0xf8] sm:$0xff]
        %v538 = vld [vmem:[%s4] sm:$0x3]
        %v540 = vlaneseq
        %v541 = vshrl.u32 %v540, 7
        %v542 = vsub.s32 0, %v541
        %v543 = vrot.slane %v538, %v542
        %v544 = vlaneseq
        %v545 = vshrl.u32 %v544, 7
        %v546 = vsub.s32 1, %v545
        %v547 = vrot.slane %v538, %v546
        %v582 = vunpack.c.l.b16 %v506
        %v583 = vunpack.c.h.b16 %v506
        %v584 = vunpack.c.l.b16 %v507
        %v585 = vunpack.c.h.b16 %v507
        %v586 = vunpack.c.l.b16 %v508
        %v587 = vunpack.c.h.b16 %v508
        %v588 = vunpack.c.l.b16 %v509
        %v589 = vunpack.c.h.b16 %v509
        %v590 = vunpack.c.l.b16 %v510
        %v591 = vunpack.c.h.b16 %v510
        %v592 = vunpack.c.l.b16 %v511
        %v593 = vunpack.c.h.b16 %v511
        %v594 = vunpack.c.l.b16 %v512
        %v595 = vunpack.c.h.b16 %v512
        %v596 = vunpack.c.l.b16 %v513
        %v597 = vunpack.c.h.b16 %v513
        %v598 = vunpack.c.l.b16 %v514
        %v599 = vunpack.c.h.b16 %v514
        %v600 = vunpack.c.l.b16 %v515
        %v601 = vunpack.c.h.b16 %v515
        %v602 = vunpack.c.l.b16 %v516
        %v603 = vunpack.c.h.b16 %v516
        %v604 = vunpack.c.l.b16 %v517
        %v605 = vunpack.c.h.b16 %v517
        %v606 = vunpack.c.l.b16 %v518
        %v607 = vunpack.c.h.b16 %v518
        %v608 = vunpack.c.l.b16 %v519
        %v609 = vunpack.c.h.b16 %v519
        %v610 = vunpack.c.l.b16 %v520
        %v611 = vunpack.c.h.b16 %v520
        %v612 = vunpack.c.l.b16 %v521
        %v613 = vunpack.c.h.b16 %v521
        %v614 = vunpack.c.l.b16 %v522
        %v615 = vunpack.c.h.b16 %v522
        %v616 = vunpack.c.l.b16 %v523
        %v617 = vunpack.c.h.b16 %v523
        %v618 = vunpack.c.l.b16 %v524
        %v619 = vunpack.c.h.b16 %v524
        %v620 = vunpack.c.l.b16 %v525
        %v621 = vunpack.c.h.b16 %v525
        %v622 = vunpack.c.l.b16 %v526
        %v623 = vunpack.c.h.b16 %v526
        %v624 = vunpack.c.l.b16 %v527
        %v625 = vunpack.c.h.b16 %v527
        %v626 = vunpack.c.l.b16 %v528
        %v627 = vunpack.c.h.b16 %v528
        %v628 = vunpack.c.l.b16 %v529
        %v629 = vunpack.c.h.b16 %v529
        %v630 = vunpack.c.l.b16 %v530
        %v631 = vunpack.c.h.b16 %v530
        %v632 = vunpack.c.l.b16 %v531
        %v633 = vunpack.c.h.b16 %v531
        %v634 = vunpack.c.l.b16 %v532
        %v635 = vunpack.c.h.b16 %v532
        %v636 = vunpack.c.l.b16 %v533
        %v637 = vunpack.c.h.b16 %v533
        %v638 = vunpack.c.l.b16 %v534
        %v639 = vunpack.c.h.b16 %v534
        %v640 = vunpack.c.l.b16 %v535
        %v641 = vunpack.c.h.b16 %v535
        %v642 = vunpack.c.l.b16 %v536
        %v643 = vunpack.c.h.b16 %v536
        %v644 = vunpack.c.l.b16 %v537
        %v645 = vunpack.c.h.b16 %v537
        %v646 = vpack.c.b16 %v584, %v582
        %v647 = vpack.c.b16 %v585, %v583
        %v648 = vpack.c.b16 %v588, %v586
        %v649 = vpack.c.b16 %v589, %v587
        %v650 = vpack.c.b16 %v592, %v590
        %v651 = vpack.c.b16 %v593, %v591
        %v652 = vpack.c.b16 %v596, %v594
        %v653 = vpack.c.b16 %v597, %v595
        %v654 = vpack.c.b16 %v600, %v598
        %v655 = vpack.c.b16 %v601, %v599
        %v656 = vpack.c.b16 %v604, %v602
        %v657 = vpack.c.b16 %v605, %v603
        %v658 = vpack.c.b16 %v608, %v606
        %v659 = vpack.c.b16 %v609, %v607
        %v660 = vpack.c.b16 %v612, %v610
        %v661 = vpack.c.b16 %v613, %v611
        %v662 = vpack.c.b16 %v616, %v614
        %v663 = vpack.c.b16 %v617, %v615
        %v664 = vpack.c.b16 %v620, %v618
        %v665 = vpack.c.b16 %v621, %v619
        %v666 = vpack.c.b16 %v624, %v622
        %v667 = vpack.c.b16 %v625, %v623
        %v668 = vpack.c.b16 %v628, %v626
        %v669 = vpack.c.b16 %v629, %v627
        %v670 = vpack.c.b16 %v632, %v630
        %v671 = vpack.c.b16 %v633, %v631
        %v672 = vpack.c.b16 %v636, %v634
        %v673 = vpack.c.b16 %v637, %v635
        %v674 = vpack.c.b16 %v640, %v638
        %v675 = vpack.c.b16 %v641, %v639
        %v676 = vpack.c.b16 %v644, %v642
        %v677 = vpack.c.b16 %v645, %v643
        %710 = vmatprep.subr.bf16.mxu0 %v647
        %711 = vmatpush1.bf16.msra.mxu0 %v646
        %712 = vmatprep.subr.bf16.mxu0 %v649
        %713 = vmatpush1.bf16.msra.mxu0 %v648
        %714 = vmatprep.subr.bf16.mxu0 %v651
        %715 = vmatpush1.bf16.msra.mxu0 %v650
        %716 = vmatprep.subr.bf16.mxu0 %v653
        %717 = vmatpush1.bf16.msra.mxu0 %v652
        %718 = vmatprep.subr.bf16.mxu0 %v655
        %719 = vmatpush1.bf16.msra.mxu0 %v654
        %720 = vmatprep.subr.bf16.mxu0 %v657
        %721 = vmatpush1.bf16.msra.mxu0 %v656
        %722 = vmatprep.subr.bf16.mxu0 %v659
        %723 = vmatpush1.bf16.msra.mxu0 %v658
        %724 = vmatprep.subr.bf16.mxu0 %v661
        %725 = vmatpush1.bf16.msra.mxu0 %v660
        %726 = vmatprep.subr.bf16.mxu0 %v663
        %727 = vmatpush1.bf16.msra.mxu0 %v662
        %728 = vmatprep.subr.bf16.mxu0 %v665
        %729 = vmatpush1.bf16.msra.mxu0 %v664
        %730 = vmatprep.subr.bf16.mxu0 %v667
        %731 = vmatpush1.bf16.msra.mxu0 %v666
        %732 = vmatprep.subr.bf16.mxu0 %v669
        %733 = vmatpush1.bf16.msra.mxu0 %v668
        %734 = vmatprep.subr.bf16.mxu0 %v671
        %735 = vmatpush1.bf16.msra.mxu0 %v670
        %736 = vmatprep.subr.bf16.mxu0 %v673
        %737 = vmatpush1.bf16.msra.mxu0 %v672
        %738 = vmatprep.subr.bf16.mxu0 %v675
        %739 = vmatpush1.bf16.msra.mxu0 %v674
        %740 = vmatprep.subr.bf16.mxu0 %v677
        %741 = vmatpush1.bf16.msra.mxu0 %v676
        %742 = vmatprep.mubr.bf16.mxu0 %v503
        %743 = vmatmul.mubr.bf16.gmra.mrb[0].mxu0 %v502
        %v744 = vpop.f32.mrb[0].mxu0
        %v745 = vadd.f32 %v543, %v744
        %v746 = vpop.f32.mrb[0].mxu0
        %v747 = vadd.f32 %v547, %v746
        %v748 = vpop.f32.mrb[0].mxu0
        %v749 = vadd.f32 %v543, %v748
        %v750 = vpop.f32.mrb[0].mxu0
        %v751 = vadd.f32 %v547, %v750
        %752 = vmatprep.mubr.bf16.mxu0 %v505
        %753 = vmatmul.mubr.bf16.gmra.mrb[0].mxu0 %v504
        %v754 = vpop.f32.mrb[0].mxu0
        %v755 = vadd.f32 %v543, %v754
        %v756 = vpop.f32.mrb[0].mxu0
        %v757 = vadd.f32 %v547, %v756
        %v758 = vpop.f32.mrb[0].mxu0
        %v759 = vadd.f32 %v543, %v758
        %v760 = vpop.f32.mrb[0].mxu0
        %v761 = vadd.f32 %v547, %v760
        %762 = vdwg.mxu0
        %v763 = vmax.f32 %v745, 0.0
        %v764 = vmax.f32 %v747, 0.0
        %v765 = vmax.f32 %v749, 0.0
        %v766 = vmax.f32 %v751, 0.0
        %v767 = vmax.f32 %v755, 0.0
        %v768 = vmax.f32 %v757, 0.0
        %v769 = vmax.f32 %v759, 0.0
        %v770 = vmax.f32 %v761, 0.0
        %v771 = vld [vmem:[%s5] sm:$0x3]
        %v773 = vlaneseq
        %v774 = vshrl.u32 %v773, 7
        %v775 = vsub.s32 0, %v774
        %v776 = vrot.slane %v771, %v775
        %v777 = vlaneseq
        %v778 = vshrl.u32 %v777, 7
        %v779 = vsub.s32 1, %v778
        %v780 = vrot.slane %v771, %v779
        %v783 = vmul.f32 %v763, %v776
        %v784 = vmul.f32 %v764, %v780
        %v785 = vmul.f32 %v765, %v776
        %v786 = vmul.f32 %v766, %v780
        %v787 = vmul.f32 %v767, %v776
        %v788 = vmul.f32 %v768, %v780
        %v789 = vmul.f32 %v769, %v776
        %v790 = vmul.f32 %v770, %v780
        %v791 = vadd.f32 %v783, %v784
        %792 = vadd.xlane.f32.xlu0 %v791
        %v793 = vpop.xlane.xlu0 %792
        %v794 = vadd.f32 %v785, %v786
        %795 = vadd.xlane.f32.xlu0 %v794
        %v796 = vpop.xlane.xlu0 %795
        %v797 = vadd.f32 %v787, %v788
        %798 = vadd.xlane.f32.xlu0 %v797
        %v799 = vpop.xlane.xlu0 %798
        %v800 = vadd.f32 %v789, %v790
        %801 = vadd.xlane.f32.xlu0 %v800
        %v802 = vpop.xlane.xlu0 %801
        %v803 = vld [vmem:[#allocation2] sm:$0x1]
        %805 = vset.pattern.permute.xlu0 0
        %806 = vperm.xlu0 %805, %v803
        %v807 = vpop.permute.xlu0 %806
        %v809 = vlaneseq
        %v810 = vshrl.u32 %v809, 7
        %v811 = vsub.s32 0, %v810
        %v812 = vrot.slane %v807, %v811
        %v813 = vadd.f32 %v793, %v812
        %v814 = vadd.f32 %v796, %v812
        %v815 = vadd.f32 %v799, %v812
        %v816 = vadd.f32 %v802, %v812
        %v821 = vlaneseq
        %v822 = vand.u32 %v821, 127
        %v823 = vlaneseq
        %v824 = vshrl.u32 %v823, 7
        %v825 = vsub.s32 %v822, %v824
        %v826 = vrot.slane %v813, %v825
        %v827 = vadd.s32 %v822, 4294967288
        %v828 = vlaneseq
        %v829 = vshrl.u32 %v828, 7
        %v830 = vsub.s32 %v827, %v829
        %v831 = vrot.slane %v814, %v830
        %vm832 = vcmask 130112
        %v833 = vsel %vm832, %v831, %v826
        %v834 = vadd.s32 %v822, 4294967280
        %v835 = vlaneseq
        %v836 = vshrl.u32 %v835, 7
        %v837 = vsub.s32 %v834, %v836
        %v838 = vrot.slane %v815, %v837
        %vm839 = vcmask 195712
        %v840 = vsel %vm839, %v838, %v833
        %v841 = vadd.s32 %v822, 4294967272
        %v842 = vlaneseq
        %v843 = vshrl.u32 %v842, 7
        %v844 = vsub.s32 %v841, %v843
        %v845 = vrot.slane %v816, %v844
        %vm846 = vcmask 261312
        %v847 = vsel %vm846, %v845, %v840
        %vm849 = vcmask 253952
        %850 = vst.msk [vmem:[%s288] sm:$0x1] %vm849, %v847
        %s851 = sand.u32 %s184, 1
        %s852 = scalar_lea.sflag [#allocation5], %s851
        %s853 = sand.u32 %s184, 1
        %s854 = scalar_lea.vmem [#allocation6], %s853
        // Predicated region
        $region53: #{tpu_custom_call.1} parent=47 // pred_check
          %p855 = pneg %p194
        $region54: #{tpu_custom_call.1} parent=47 // pred_check_branch
          %857 = sbr.rel (%p855) target = $region56
        $region55: #{tpu_custom_call.1} parent=47 // pred_region
          %s859 = ssub.s32 16, 16
          %860 = vsyncadd %s852, %s859
          %s861 = smul.addr %s24, 16
          %s862 = scalar_lea.hbm %s7, %s861
          %s864 = sshll.u32 %s854, 4
          %s865 = int_to_ptr.vmem [resolvable:$true] %s864
          %867 = dma.vmem_to_hbm [thread:$0]  %s865, 16, %s862, %s852
        $region56: #{tpu_custom_call.1} parent=47 // pred_fallthru
          _
      $region48: #{tpu_custom_call.1} parent=5 // pred_fallthru
        _
      %p868 = scmp.le.s32.totalorder 2, %s19
      // Predicated region
      $region57: #{tpu_custom_call.1} parent=5 // pred_check
        %p869 = pneg %p868
      $region58: #{tpu_custom_call.1} parent=5 // pred_check_branch
        %871 = sbr.rel (%p869) target = $region60
      $region59: #{tpu_custom_call.1} parent=5 // pred_region
        %s872 = ssub.s32 %s19, 2
        // Predicated region
        $region61: #{tpu_custom_call.1} parent=59 // pred_check
          %p873 = pneg %p200
        $region62: #{tpu_custom_call.1} parent=59 // pred_check_branch
          %875 = sbr.rel (%p873) target = $region64
        $region63: #{tpu_custom_call.1} parent=59 // pred_region
          %s876 = sand.u32 %s185, 1
          %s877 = scalar_lea.sflag [#allocation5], %s876
          %s878 = sand.u32 %s185, 1
          %s879 = scalar_lea.vmem [#allocation6], %s878
          %880 = dma.done %s877, 16
        $region64: #{tpu_custom_call.1} parent=59 // pred_fallthru
          _
      $region60: #{tpu_custom_call.1} parent=5 // pred_fallthru
        _
    $region6: #{tpu_custom_call.1} parent=1 // loop_footer
      %s23 = sadd.s32 1, %s19
    $region7: #{tpu_custom_call.1} parent=1 // loop_footer_branch
      %18 = sbr.rel target = $region3
    $region8: #{tpu_custom_call.1} parent=1 // loop_exit
      _
    %881 = vsyncpa [#allocation4], 1
    %s882 = scalar_lea.sflag [#allocation4], 1
    %883 = vsyncpa %s882, 1
    %884 = vsyncpa [#allocation5], 1
    %s885 = scalar_lea.sflag [#allocation5], 1
    %886 = vsyncpa %s885, 1

</llo_original>
